<compile_context>
chip_gen: v6e
topology: v6e:2x2x1
jax: 0.10.0
libtpu: 0.0.40
codegen_flags: <defaults>
</compile_context>

<pallas_src>
import functools

import jax
import jax.numpy as jnp
from jax.experimental import pallas as pl
from jax.experimental.pallas import tpu as pltpu


def _round_up(x, m):
    return (x + m - 1) // m * m


def _feature_resizer_kernel(x_ref, w_ref, p_ref, o_ref, *, do_ln, matmul_dtype, precision):
    # x_ref: (TM, D_in)        native dtype
    # w_ref: (D_in, D_out)     native dtype (or matmul_dtype, cast once in the wrapper)
    # p_ref: (3, D_out) f32    rows = [bias; gamma; beta]
    # o_ref: (TM, D_out)
    x = x_ref[...]
    if matmul_dtype is not None:
        x = x.astype(matmul_dtype)  # MXU-native operands; accumulation stays f32

    # Linear: y = x @ W + b  (MXU, f32 accumulation).
    y = jnp.dot(x, w_ref[...], preferred_element_type=jnp.float32, precision=precision)
    y = y + p_ref[0:1, :]

    if do_ln:
        # LayerNorm over the feature axis, eps = 1e-12.
        # Two-pass (centered) variance for numeric parity with torch.nn.LayerNorm.
        mean = jnp.mean(y, axis=-1, keepdims=True)
        yc = y - mean
        var = jnp.mean(yc * yc, axis=-1, keepdims=True)
        inv = jax.lax.rsqrt(var + 1e-12)
        y = yc * inv * p_ref[1:2, :] + p_ref[2:3, :]

    # Dropout: identity (eval mode).
    o_ref[...] = y.astype(o_ref.dtype)


def feature_resizer(x, weight, bias, gamma, beta, *, do_ln=True, tm=512,
                    matmul_dtype=None, precision=None,
                    vmem_limit_bytes=48 * 1024 * 1024):
    """Fused forward of FeatureResizer (eval mode).

    x:      [B, S, D_in]
    weight: [D_in, D_out]  (already transposed from torch's [out, in])
    bias, gamma, beta: [D_out]
    matmul_dtype: e.g. jnp.bfloat16 to run the matmul on MXU-native operands
                  (f32 accumulation kept); None = use native dtype (exact parity).
    Returns [B, S, D_out] in x.dtype.
    """
    B, S, D_in = x.shape
    D_out = weight.shape[1]
    N = B * S
    dtype = x.dtype
    itemsize = jnp.dtype(dtype).itemsize

    # Sublane packing granularity: 8 rows for 4-byte dtypes, 16 for bf16, 32 for int8.
    sub = max(8, 32 // itemsize)

    # Large row tile by default (amortizes ~0.35us/step pipeline overhead); clamp so
    # tiny inputs don't over-allocate.
    tm = max(sub, min(_round_up(tm, sub), _round_up(N, sub)))

    # Stage the grid-invariant operands.  No feature padding: full-extent feature
    # blocks are legal; typical widths (e.g. 1024->256) are lane-dense already, and
    # skipping the pad/slice avoids an extra full HBM round trip of x and out.
    w2 = weight if matmul_dtype is None else weight.astype(matmul_dtype)
    params = jnp.stack([bias.astype(jnp.float32),
                        gamma.astype(jnp.float32),
                        beta.astype(jnp.float32)], axis=0)  # (3, D_out): one DMA/buffer
    w_itemsize = jnp.dtype(w2.dtype).itemsize

    # VMEM estimate (v7x has only 64 MiB/TC and replicates W into both TCs with the
    # row-parallel grid): shrink tm until the working set fits inside ~80% of the
    # requested limit.  Weight & params are single-buffered below.
    d_in_l = _round_up(D_in, 128)
    d_out_l = _round_up(D_out, 128)

    def vmem_estimate(tm_):
        x_b = 2 * tm_ * d_in_l * itemsize                     # x row-tile, double-buffered
        o_b = 2 * tm_ * d_out_l * itemsize                    # out tile, double-buffered
        w_b = _round_up(D_in, sub) * d_out_l * w_itemsize     # weight, Buffered(1)
        p_b = 8 * d_out_l * 4                                 # params, Buffered(1)
        tmp = 3 * tm_ * d_out_l * 4                           # f32 y / centered / scaled temps
        return x_b + o_b + w_b + p_b + tmp

    budget = int(vmem_limit_bytes * 0.8)
    while vmem_estimate(tm) > budget and tm > sub:
        tm = max(sub, _round_up(tm // 2, sub))

    x2 = x.reshape(N, D_in)  # contiguous reshape: free, no HBM copy

    kernel = functools.partial(_feature_resizer_kernel, do_ln=do_ln,
                               matmul_dtype=matmul_dtype, precision=precision)

    invariant = pl.Buffered(1)  # constant index_map -> no double buffer needed
    out = pl.pallas_call(
        kernel,
        out_shape=jax.ShapeDtypeStruct((N, D_out), dtype),
        grid_spec=pltpu.PrefetchScalarGridSpec(
            num_scalar_prefetch=0,
            grid=(pl.cdiv(N, tm),),   # ragged N: last partial tile masked by Pallas
            in_specs=[
                pl.BlockSpec((tm, D_in), lambda i: (i, 0)),                         # x rows
                pl.BlockSpec((D_in, D_out), lambda i: (0, 0), pipeline_mode=invariant),  # W
                pl.BlockSpec((3, D_out), lambda i: (0, 0), pipeline_mode=invariant),     # b/g/beta
            ],
            out_specs=pl.BlockSpec((tm, D_out), lambda i: (i, 0)),
        ),
        compiler_params=pltpu.CompilerParams(
            dimension_semantics=("parallel",),   # row grid shards across v7x's 2 TCs
            vmem_limit_bytes=vmem_limit_bytes,   # 48 MiB: headroom inside v7x's 64 MiB
        ),
    )(x2, w2, params)

    return out.reshape(B, S, D_out)


if __name__ == "__main__":
    # Small, deterministic config consistent with the module's forward.
    B, S = 2, 8
    D_in, D_out = 32, 64

    key = jax.random.PRNGKey(0)
    kx, kw, kb = jax.random.split(key, 3)

    x = jax.random.normal(kx, (B, S, D_in), dtype=jnp.float32)

    # Deterministic parameter init (Kaiming-uniform-ish scale like nn.Linear).
    bound = 1.0 / (D_in ** 0.5)
    weight = jax.random.uniform(kw, (D_in, D_out), minval=-bound, maxval=bound,
                                dtype=jnp.float32)
    bias = jax.random.uniform(kb, (D_out,), minval=-bound, maxval=bound,
                              dtype=jnp.float32)
    gamma = jnp.ones((D_out,), dtype=jnp.float32)   # nn.LayerNorm weight init
    beta = jnp.zeros((D_out,), dtype=jnp.float32)   # nn.LayerNorm bias init

    # HIGHEST precision on both sides so the f32 parity check below is tight.
    hi = jax.lax.Precision.HIGHEST
    out = feature_resizer(x, weight, bias, gamma, beta, precision=hi)
    out = jax.block_until_ready(out)

    # Reference in plain JAX (same math as the PyTorch module in eval mode).
    y = jnp.dot(x, weight, precision=hi) + bias
    mu = y.mean(-1, keepdims=True)
    var = ((y - mu) ** 2).mean(-1, keepdims=True)
    ref = (y - mu) / jnp.sqrt(var + 1e-12) * gamma + beta

    assert out.shape == (B, S, D_out)
    assert jnp.allclose(out, ref, atol=1e-5, rtol=1e-5), \
        float(jnp.max(jnp.abs(out - ref)))

    print("KERNEL_OK")
</pallas_src>

<mosaic_0001>
module attributes {stable_mosaic.version = 11 : i64} {
  func.func @_feature_resizer_kernel(%arg0: i32, %arg1: memref<16x32xf32, #tpu.memory_space<vmem>>, %arg2: memref<32x64xf32, #tpu.memory_space<vmem>>, %arg3: memref<3x64xf32, #tpu.memory_space<vmem>>, %arg4: memref<16x64xf32, #tpu.memory_space<vmem>>) attributes {dimension_semantics = [#tpu.dimension_semantics<parallel>], iteration_bounds = array<i64: 1>, scalar_prefetch = 0 : i64, scratch_operands = 0 : i64, tpu.core_type = #tpu.core_type<tc>, window_params = [{transform_indices = @transform_0, window_bounds = array<i64: 16, 32>}, {pipeline_mode = #tpu.pipeline_mode<synchronous>, transform_indices = @transform_1, window_bounds = array<i64: 32, 64>}, {pipeline_mode = #tpu.pipeline_mode<synchronous>, transform_indices = @transform_2, window_bounds = array<i64: 3, 64>}, {transform_indices = @transform_3, window_bounds = array<i64: 16, 64>}]} {
    %c0 = arith.constant 0 : index
    %c0_0 = arith.constant 0 : index
    %0 = vector.load %arg1[%c0, %c0_0] : memref<16x32xf32, #tpu.memory_space<vmem>>, vector<16x32xf32>
    %c0_1 = arith.constant 0 : index
    %c0_2 = arith.constant 0 : index
    %1 = vector.load %arg2[%c0_1, %c0_2] : memref<32x64xf32, #tpu.memory_space<vmem>>, vector<32x64xf32>
    %cst = arith.constant dense<0.000000e+00> : vector<16x64xf32>
    %2 = tpu.matmul %0, %1, %cst {dimension_numbers = #tpu.dot_dimension_numbers<[1], [0], [0], [1], [0, 0, 1, 1], [], []>, precision = #tpu.contract_precision<fp32>} : vector<16x32xf32>, vector<32x64xf32>, vector<16x64xf32> -> vector<16x64xf32>
    %c0_3 = arith.constant 0 : index
    %c0_4 = arith.constant 0 : index
    %3 = vector.load %arg3[%c0_3, %c0_4] : memref<3x64xf32, #tpu.memory_space<vmem>>, vector<1x64xf32>
    %4 = vector.broadcast %3 : vector<1x64xf32> to vector<16x64xf32>
    %5 = arith.addf %2, %4 : vector<16x64xf32>
    %cst_5 = arith.constant dense<0.000000e+00> : vector<16xf32>
    %6 = vector.multi_reduction <add>, %5, %cst_5 [1] : vector<16x64xf32> to vector<16xf32>
    %7 = vector.shape_cast %6 : vector<16xf32> to vector<16x1xf32>
    %cst_6 = arith.constant 6.400000e+01 : f32
    %8 = vector.broadcast %cst_6 : f32 to vector<16x1xf32>
    %9 = arith.divf %7, %8 : vector<16x1xf32>
    %10 = vector.broadcast %9 : vector<16x1xf32> to vector<16x64xf32>
    %11 = arith.subf %5, %10 : vector<16x64xf32>
    %12 = arith.mulf %11, %11 : vector<16x64xf32>
    %cst_7 = arith.constant dense<0.000000e+00> : vector<16xf32>
    %13 = vector.multi_reduction <add>, %12, %cst_7 [1] : vector<16x64xf32> to vector<16xf32>
    %14 = vector.shape_cast %13 : vector<16xf32> to vector<16x1xf32>
    %cst_8 = arith.constant 6.400000e+01 : f32
    %15 = vector.broadcast %cst_8 : f32 to vector<16x1xf32>
    %16 = arith.divf %14, %15 : vector<16x1xf32>
    %cst_9 = arith.constant 9.99999996E-13 : f32
    %17 = vector.broadcast %cst_9 : f32 to vector<16x1xf32>
    %18 = arith.addf %16, %17 : vector<16x1xf32>
    %19 = math.rsqrt %18 : vector<16x1xf32>
    %20 = vector.broadcast %19 : vector<16x1xf32> to vector<16x64xf32>
    %21 = arith.mulf %11, %20 : vector<16x64xf32>
    %c1 = arith.constant 1 : index
    %c0_10 = arith.constant 0 : index
    %22 = vector.load %arg3[%c1, %c0_10] : memref<3x64xf32, #tpu.memory_space<vmem>>, vector<1x64xf32>
    %23 = vector.broadcast %22 : vector<1x64xf32> to vector<16x64xf32>
    %24 = arith.mulf %21, %23 : vector<16x64xf32>
    %c2 = arith.constant 2 : index
    %c0_11 = arith.constant 0 : index
    %25 = vector.load %arg3[%c2, %c0_11] : memref<3x64xf32, #tpu.memory_space<vmem>>, vector<1x64xf32>
    %26 = vector.broadcast %25 : vector<1x64xf32> to vector<16x64xf32>
    %27 = arith.addf %24, %26 : vector<16x64xf32>
    %c0_12 = arith.constant 0 : index
    %c0_13 = arith.constant 0 : index
    %28 = vector.load %arg4[%c0_12, %c0_13] : memref<16x64xf32, #tpu.memory_space<vmem>>, vector<16x64xf32>
    tpu.vector_store %arg4[%c0_12, %c0_13], %27 {strides = array<i32>} : memref<16x64xf32, #tpu.memory_space<vmem>>, vector<16x64xf32>,
    return
  }
  func.func @transform_0(%arg0: i32) -> (i32, i32) {
    %c0_i32 = arith.constant 0 : i32
    %c0_i32_0 = arith.constant 0 : i32
    return %arg0, %c0_i32 : i32, i32
  }
  func.func @transform_1(%arg0: i32) -> (i32, i32) {
    %c0_i32 = arith.constant 0 : i32
    %c0_i32_0 = arith.constant 0 : i32
    %c0_i32_1 = arith.constant 0 : i32
    return %c0_i32, %c0_i32_0 : i32, i32
  }
  func.func @transform_2(%arg0: i32) -> (i32, i32) {
    %c0_i32 = arith.constant 0 : i32
    %c0_i32_0 = arith.constant 0 : i32
    %c0_i32_1 = arith.constant 0 : i32
    return %c0_i32, %c0_i32_0 : i32, i32
  }
  func.func @transform_3(%arg0: i32) -> (i32, i32) {
    %c0_i32 = arith.constant 0 : i32
    %c0_i32_0 = arith.constant 0 : i32
    return %arg0, %c0_i32 : i32, i32
  }
}

</mosaic_0001>

<llo_original>
// kernel: tpu_custom_call.1
$region0: #{tpu_custom_call.1}
  #allocation0 [shape = 'u32[]', space=smem, size = 0x4, offset = 0x4, fixed_abs, tag = 'smem constant byte address 0x4 - core index']
  #allocation1 [shape = 'u32[144,128]{1,0:T(1,128)}', space=vmem, size = 0x12000, scoped, tag = 'internal scratch']
  %s0 = inlined_call_operand.hbm [shape: f32[16,32], index: 0, kind: input, shape index: {}]
  %s1 = inlined_call_operand.hbm [shape: f32[32,64], index: 1, kind: input, shape index: {}]
  %s2 = inlined_call_operand.hbm [shape: f32[3,64], index: 2, kind: input, shape index: {}]
  %s3 = inlined_call_operand.hbm [shape: f32[16,64], index: 3, kind: output, shape index: {}]
  %s4 = sld [smem:[#allocation0]]
  $region34: #{tpu_custom_call.1} parent=0
    _
  %s6 = ssub.s32 1, %s4
  %s7 = scalar_select 0, %s6, %s4
  $region1: #{tpu_custom_call.1} parent=0
    #allocation2 [shape = 'u8[8192]{0}', space=vmem, size = 0x2000, scoped, tag = 'input window, operand 0, single buffered']
    #allocation3 [shape = 's32[1]{0}', space=sflag, size = 0x4, scoped, tag = 'scoped memory for tpu_custom_call.1']
    #allocation4 [shape = 's32[1]{0}', space=sflag, size = 0x4, scoped, tag = 'scoped memory for tpu_custom_call.1']
    #allocation5 [shape = 'u8[16384]{0}', space=vmem, size = 0x4000, scoped, tag = 'input window, operand 1, single buffered']
    #allocation6 [shape = 's32[1]{0}', space=sflag, size = 0x4, scoped, tag = 'scoped memory for tpu_custom_call.1']
    #allocation7 [shape = 'u8[2048]{0}', space=vmem, size = 0x800, scoped, tag = 'input window, operand 2, single buffered']
    #allocation8 [shape = 'u8[8192]{0}', space=vmem, size = 0x2000, scoped, tag = 'output window, operand 0, single buffered']
    %8 = vsyncpa [#allocation3], 0
    %9 = vsyncpa [#allocation6], 0
    %10 = vsyncpa [#allocation4], 0
    // Predicated region
    $region2: #{tpu_custom_call.1} parent=1 // pred_check
      _
    $region3: #{tpu_custom_call.1} parent=1 // pred_check_branch
      %12 = sbr.rel (0) target = $region5
    $region4: #{tpu_custom_call.1} parent=1 // pred_region
      %s14 = ssub.s32 256, 256
      %15 = vsyncadd [#allocation3], %s14
      %s16 = sshll.u32 [#allocation2], 4
      %s17 = int_to_ptr.vmem [resolvable:$true] %s16
      %22 = dma.hbm_to_vmem [thread:$0]  %s0, 256, %s17, [#allocation3], 128, 128, 8
    $region5: #{tpu_custom_call.1} parent=1 // pred_fallthru
      _
    // Predicated region
    $region6: #{tpu_custom_call.1} parent=1 // pred_check
      _
    $region7: #{tpu_custom_call.1} parent=1 // pred_check_branch
      %24 = sbr.rel (0) target = $region9
    $region8: #{tpu_custom_call.1} parent=1 // pred_region
      %s26 = ssub.s32 512, 512
      %27 = vsyncadd [#allocation6], %s26
      %s28 = sshll.u32 [#allocation5], 4
      %s29 = int_to_ptr.vmem [resolvable:$true] %s28
      %34 = dma.hbm_to_vmem [thread:$0]  %s1, 512, %s29, [#allocation6], 128, 128, 8
    $region9: #{tpu_custom_call.1} parent=1 // pred_fallthru
      _
    // Predicated region
    $region10: #{tpu_custom_call.1} parent=1 // pred_check
      _
    $region11: #{tpu_custom_call.1} parent=1 // pred_check_branch
      %36 = sbr.rel (0) target = $region13
    $region12: #{tpu_custom_call.1} parent=1 // pred_region
      %s38 = ssub.s32 64, 64
      %39 = vsyncadd [#allocation6], %s38
      %s41 = sshll.u32 [#allocation7], 4
      %s42 = int_to_ptr.vmem [resolvable:$true] %s41
      %44 = dma.hbm_to_vmem [thread:$0]  %s2, 64, %s42, [#allocation6]
    $region13: #{tpu_custom_call.1} parent=1 // pred_fallthru
      _
    // Predicated region
    $region14: #{tpu_custom_call.1} parent=1 // pred_check
      _
    $region15: #{tpu_custom_call.1} parent=1 // pred_check_branch
      %46 = sbr.rel (0) target = $region17
    $region16: #{tpu_custom_call.1} parent=1 // pred_region
      %47 = dma.done [#allocation3], 256
    $region17: #{tpu_custom_call.1} parent=1 // pred_fallthru
      _
    // Predicated region
    $region18: #{tpu_custom_call.1} parent=1 // pred_check
      _
    $region19: #{tpu_custom_call.1} parent=1 // pred_check_branch
      %49 = sbr.rel (0) target = $region21
    $region20: #{tpu_custom_call.1} parent=1 // pred_region
      %50 = dma.done [#allocation6], 512
    $region21: #{tpu_custom_call.1} parent=1 // pred_fallthru
      _
    // Predicated region
    $region22: #{tpu_custom_call.1} parent=1 // pred_check
      _
    $region23: #{tpu_custom_call.1} parent=1 // pred_check_branch
      %52 = sbr.rel (0) target = $region25
    $region24: #{tpu_custom_call.1} parent=1 // pred_region
      %53 = dma.done [#allocation6], 64
    $region25: #{tpu_custom_call.1} parent=1 // pred_fallthru
      _
    %v54 = vld [vmem:[#allocation2] sm:$0xff]
    %v55 = vld [vmem:[#allocation2 + $0x8] sm:$0xff]
    %v56 = vld [vmem:[#allocation5] sm:$0xff]
    %v57 = vld [vmem:[#allocation5 + $0x8] sm:$0xff]
    %v58 = vld [vmem:[#allocation5 + $0x10] sm:$0xff]
    %v59 = vld [vmem:[#allocation5 + $0x18] sm:$0xff]
    %v60 = vld [vmem:[#allocation7] sm:$0x1]
    %v61 = vlaneseq
    %v62 = vshrl.u32 %v61, 7
    %v63 = vsub.s32 0, %v62
    %v64 = vrot.slane %v60, %v63
    %vm65 = vcmask 261120
    %v67 = vsel %vm65, %v54, 0
    %v70 = vsel %vm65, %v55, 0
    %72 = vmatprep.subr.mxu0 0.0
    %73 = vmatpush1.msra.mxu0 0.0
    %74 = vmatprep.subr.mxu0 0.0
    %75 = vmatpush1.msra.mxu0 0.0
    %76 = vmatprep.subr.mxu0 0.0
    %77 = vmatpush1.msra.mxu0 0.0
    %78 = vmatprep.subr.mxu0 0.0
    %79 = vmatpush1.msra.mxu0 0.0
    %80 = vmatprep.subr.mxu0 0.0
    %81 = vmatpush1.msra.mxu0 0.0
    %82 = vmatprep.subr.mxu0 0.0
    %83 = vmatpush1.msra.mxu0 0.0
    %84 = vmatprep.subr.mxu0 0.0
    %85 = vmatpush1.msra.mxu0 0.0
    %86 = vmatprep.subr.mxu0 0.0
    %87 = vmatpush1.msra.mxu0 0.0
    %88 = vmatprep.subr.mxu0 0.0
    %89 = vmatpush1.msra.mxu0 0.0
    %90 = vmatprep.subr.mxu0 0.0
    %91 = vmatpush1.msra.mxu0 0.0
    %92 = vmatprep.subr.mxu0 0.0
    %93 = vmatpush1.msra.mxu0 0.0
    %94 = vmatprep.subr.mxu0 0.0
    %95 = vmatpush1.msra.mxu0 0.0
    %96 = vmatprep.subr.mxu0 0.0
    %v97 = vand.u32 %v59, 4294901760
    %98 = vmatpush1.msra.mxu0 %v97
    %99 = vmatprep.subr.mxu0 0.0
    %v100 = vand.u32 %v58, 4294901760
    %101 = vmatpush1.msra.mxu0 %v100
    %102 = vmatprep.subr.mxu0 0.0
    %v103 = vand.u32 %v57, 4294901760
    %104 = vmatpush1.msra.mxu0 %v103
    %105 = vmatprep.subr.mxu0 0.0
    %v106 = vand.u32 %v56, 4294901760
    %107 = vmatpush1.msra.mxu0 %v106
    %108 = vmatprep.subr.mxu0 0.0
    %109 = vmatpush2.msra.mxu0 0.0
    %110 = vmatprep.subr.mxu0 0.0
    %111 = vmatpush2.msra.mxu0 0.0
    %112 = vmatprep.subr.mxu0 0.0
    %113 = vmatpush2.msra.mxu0 0.0
    %114 = vmatprep.subr.mxu0 0.0
    %115 = vmatpush2.msra.mxu0 0.0
    %116 = vmatprep.subr.mxu0 0.0
    %117 = vmatpush2.msra.mxu0 0.0
    %118 = vmatprep.subr.mxu0 0.0
    %119 = vmatpush2.msra.mxu0 0.0
    %120 = vmatprep.subr.mxu0 0.0
    %121 = vmatpush2.msra.mxu0 0.0
    %122 = vmatprep.subr.mxu0 0.0
    %123 = vmatpush2.msra.mxu0 0.0
    %124 = vmatprep.subr.mxu0 0.0
    %125 = vmatpush2.msra.mxu0 0.0
    %126 = vmatprep.subr.mxu0 0.0
    %127 = vmatpush2.msra.mxu0 0.0
    %128 = vmatprep.subr.mxu0 0.0
    %129 = vmatpush2.msra.mxu0 0.0
    %130 = vmatprep.subr.mxu0 0.0
    %131 = vmatpush2.msra.mxu0 0.0
    %132 = vmatprep.subr.mxu0 0.0
    %133 = vmatpush2.msra.mxu0 0.0
    %134 = vmatprep.subr.mxu0 0.0
    %135 = vmatpush2.msra.mxu0 0.0
    %136 = vmatprep.subr.mxu0 0.0
    %137 = vmatpush2.msra.mxu0 0.0
    %138 = vmatprep.subr.mxu0 0.0
    %139 = vmatpush2.msra.mxu0 0.0
    %140 = vmatprep.mubr.f32.mxu0 0.0
    %v141 = vand.u32 %v67, 4294901760
    %v142 = vsub.f32 %v67, %v141
    %v143 = vand.u32 %v142, 4294901760
    %v144 = vsub.f32 %v142, %v143
    %v145 = vand.u32 %v144, 4294901760
    %146 = vmatmul.mubr.f32.gmra.mxu0 %v145
    %v147 = vpop.f32.mrf.mxu0
    %v148 = vadd.f32 %v64, %v147
    %v149 = vpop.f32.mrf.mxu0
    %150 = vmatprep.mubr.f32.mxu0 0.0
    %v151 = vand.u32 %v70, 4294901760
    %v152 = vsub.f32 %v70, %v151
    %v153 = vand.u32 %v152, 4294901760
    %v154 = vsub.f32 %v152, %v153
    %v155 = vand.u32 %v154, 4294901760
    %156 = vmatmul.mubr.f32.gmra.mxu0 %v155
    %v157 = vpop.f32.mrf.mxu0
    %v158 = vadd.f32 %v64, %v157
    %v159 = vpop.f32.mrf.mxu0
    %160 = vdwg.mxu0
    %161 = vmatprep.subr.mxu0 0.0
    %162 = vmatpush1.msra.mxu0 0.0
    %163 = vmatprep.subr.mxu0 0.0
    %164 = vmatpush1.msra.mxu0 0.0
    %165 = vmatprep.subr.mxu0 0.0
    %166 = vmatpush1.msra.mxu0 0.0
    %167 = vmatprep.subr.mxu0 0.0
    %168 = vmatpush1.msra.mxu0 0.0
    %169 = vmatprep.subr.mxu0 0.0
    %170 = vmatpush1.msra.mxu0 0.0
    %171 = vmatprep.subr.mxu0 0.0
    %172 = vmatpush1.msra.mxu0 0.0
    %173 = vmatprep.subr.mxu0 0.0
    %174 = vmatpush1.msra.mxu0 0.0
    %175 = vmatprep.subr.mxu0 0.0
    %176 = vmatpush1.msra.mxu0 0.0
    %177 = vmatprep.subr.mxu0 0.0
    %178 = vmatpush1.msra.mxu0 0.0
    %179 = vmatprep.subr.mxu0 0.0
    %180 = vmatpush1.msra.mxu0 0.0
    %181 = vmatprep.subr.mxu0 0.0
    %182 = vmatpush1.msra.mxu0 0.0
    %183 = vmatprep.subr.mxu0 0.0
    %184 = vmatpush1.msra.mxu0 0.0
    %185 = vmatprep.subr.mxu0 0.0
    %v186 = vand.u32 %v59, 4294901760
    %v187 = vsub.f32 %v59, %v186
    %v188 = vand.u32 %v187, 4294901760
    %v189 = vsub.f32 %v187, %v188
    %v190 = vand.u32 %v189, 4294901760
    %191 = vmatpush1.msra.mxu0 %v190
    %192 = vmatprep.subr.mxu0 0.0
    %v193 = vand.u32 %v58, 4294901760
    %v194 = vsub.f32 %v58, %v193
    %v195 = vand.u32 %v194, 4294901760
    %v196 = vsub.f32 %v194, %v195
    %v197 = vand.u32 %v196, 4294901760
    %198 = vmatpush1.msra.mxu0 %v197
    %199 = vmatprep.subr.mxu0 0.0
    %v200 = vand.u32 %v57, 4294901760
    %v201 = vsub.f32 %v57, %v200
    %v202 = vand.u32 %v201, 4294901760
    %v203 = vsub.f32 %v201, %v202
    %v204 = vand.u32 %v203, 4294901760
    %205 = vmatpush1.msra.mxu0 %v204
    %206 = vmatprep.subr.mxu0 0.0
    %v207 = vand.u32 %v56, 4294901760
    %v208 = vsub.f32 %v56, %v207
    %v209 = vand.u32 %v208, 4294901760
    %v210 = vsub.f32 %v208, %v209
    %v211 = vand.u32 %v210, 4294901760
    %212 = vmatpush1.msra.mxu0 %v211
    %213 = vmatprep.subr.mxu0 0.0
    %214 = vmatpush2.msra.mxu0 0.0
    %215 = vmatprep.subr.mxu0 0.0
    %216 = vmatpush2.msra.mxu0 0.0
    %217 = vmatprep.subr.mxu0 0.0
    %218 = vmatpush2.msra.mxu0 0.0
    %219 = vmatprep.subr.mxu0 0.0
    %220 = vmatpush2.msra.mxu0 0.0
    %221 = vmatprep.subr.mxu0 0.0
    %222 = vmatpush2.msra.mxu0 0.0
    %223 = vmatprep.subr.mxu0 0.0
    %224 = vmatpush2.msra.mxu0 0.0
    %225 = vmatprep.subr.mxu0 0.0
    %226 = vmatpush2.msra.mxu0 0.0
    %227 = vmatprep.subr.mxu0 0.0
    %228 = vmatpush2.msra.mxu0 0.0
    %229 = vmatprep.subr.mxu0 0.0
    %230 = vmatpush2.msra.mxu0 0.0
    %231 = vmatprep.subr.mxu0 0.0
    %232 = vmatpush2.msra.mxu0 0.0
    %233 = vmatprep.subr.mxu0 0.0
    %234 = vmatpush2.msra.mxu0 0.0
    %235 = vmatprep.subr.mxu0 0.0
    %236 = vmatpush2.msra.mxu0 0.0
    %237 = vmatprep.subr.mxu0 0.0
    %238 = vmatpush2.msra.mxu0 0.0
    %239 = vmatprep.subr.mxu0 0.0
    %240 = vmatpush2.msra.mxu0 0.0
    %241 = vmatprep.subr.mxu0 0.0
    %242 = vmatpush2.msra.mxu0 0.0
    %243 = vmatprep.subr.mxu0 0.0
    %244 = vmatpush2.msra.mxu0 0.0
    %245 = vmatprep.mubr.f32.mxu0 0.0
    %v246 = vand.u32 %v67, 4294901760
    %247 = vmatmul.mubr.f32.gmra.mxu0 %v246
    %v248 = vpop.f32.mrf.mxu0
    %v249 = vadd.f32 %v148, %v248
    %v250 = vpop.f32.mrf.mxu0
    %251 = vmatprep.mubr.f32.mxu0 0.0
    %v252 = vand.u32 %v70, 4294901760
    %253 = vmatmul.mubr.f32.gmra.mxu0 %v252
    %v254 = vpop.f32.mrf.mxu0
    %v255 = vadd.f32 %v158, %v254
    %v256 = vpop.f32.mrf.mxu0
    %257 = vdwg.mxu0
    %258 = vmatprep.subr.mxu0 0.0
    %259 = vmatpush1.msra.mxu0 0.0
    %260 = vmatprep.subr.mxu0 0.0
    %261 = vmatpush1.msra.mxu0 0.0
    %262 = vmatprep.subr.mxu0 0.0
    %263 = vmatpush1.msra.mxu0 0.0
    %264 = vmatprep.subr.mxu0 0.0
    %265 = vmatpush1.msra.mxu0 0.0
    %266 = vmatprep.subr.mxu0 0.0
    %267 = vmatpush1.msra.mxu0 0.0
    %268 = vmatprep.subr.mxu0 0.0
    %269 = vmatpush1.msra.mxu0 0.0
    %270 = vmatprep.subr.mxu0 0.0
    %271 = vmatpush1.msra.mxu0 0.0
    %272 = vmatprep.subr.mxu0 0.0
    %273 = vmatpush1.msra.mxu0 0.0
    %274 = vmatprep.subr.mxu0 0.0
    %275 = vmatpush1.msra.mxu0 0.0
    %276 = vmatprep.subr.mxu0 0.0
    %277 = vmatpush1.msra.mxu0 0.0
    %278 = vmatprep.subr.mxu0 0.0
    %279 = vmatpush1.msra.mxu0 0.0
    %280 = vmatprep.subr.mxu0 0.0
    %281 = vmatpush1.msra.mxu0 0.0
    %282 = vmatprep.subr.mxu0 0.0
    %v283 = vand.u32 %v59, 4294901760
    %v284 = vsub.f32 %v59, %v283
    %285 = vmatpush1.msra.mxu0 %v284
    %286 = vmatprep.subr.mxu0 0.0
    %v287 = vand.u32 %v58, 4294901760
    %v288 = vsub.f32 %v58, %v287
    %289 = vmatpush1.msra.mxu0 %v288
    %290 = vmatprep.subr.mxu0 0.0
    %v291 = vand.u32 %v57, 4294901760
    %v292 = vsub.f32 %v57, %v291
    %293 = vmatpush1.msra.mxu0 %v292
    %294 = vmatprep.subr.mxu0 0.0
    %v295 = vand.u32 %v56, 4294901760
    %v296 = vsub.f32 %v56, %v295
    %297 = vmatpush1.msra.mxu0 %v296
    %298 = vmatprep.subr.mxu0 0.0
    %299 = vmatpush2.msra.mxu0 0.0
    %300 = vmatprep.subr.mxu0 0.0
    %301 = vmatpush2.msra.mxu0 0.0
    %302 = vmatprep.subr.mxu0 0.0
    %303 = vmatpush2.msra.mxu0 0.0
    %304 = vmatprep.subr.mxu0 0.0
    %305 = vmatpush2.msra.mxu0 0.0
    %306 = vmatprep.subr.mxu0 0.0
    %307 = vmatpush2.msra.mxu0 0.0
    %308 = vmatprep.subr.mxu0 0.0
    %309 = vmatpush2.msra.mxu0 0.0
    %310 = vmatprep.subr.mxu0 0.0
    %311 = vmatpush2.msra.mxu0 0.0
    %312 = vmatprep.subr.mxu0 0.0
    %313 = vmatpush2.msra.mxu0 0.0
    %314 = vmatprep.subr.mxu0 0.0
    %315 = vmatpush2.msra.mxu0 0.0
    %316 = vmatprep.subr.mxu0 0.0
    %317 = vmatpush2.msra.mxu0 0.0
    %318 = vmatprep.subr.mxu0 0.0
    %319 = vmatpush2.msra.mxu0 0.0
    %320 = vmatprep.subr.mxu0 0.0
    %321 = vmatpush2.msra.mxu0 0.0
    %322 = vmatprep.subr.mxu0 0.0
    %323 = vmatpush2.msra.mxu0 0.0
    %324 = vmatprep.subr.mxu0 0.0
    %325 = vmatpush2.msra.mxu0 0.0
    %326 = vmatprep.subr.mxu0 0.0
    %327 = vmatpush2.msra.mxu0 0.0
    %328 = vmatprep.subr.mxu0 0.0
    %329 = vmatpush2.msra.mxu0 0.0
    %330 = vmatprep.mubr.f32.mxu0 0.0
    %v331 = vand.u32 %v67, 4294901760
    %v332 = vsub.f32 %v67, %v331
    %333 = vmatmul.mubr.f32.gmra.mxu0 %v332
    %v334 = vpop.f32.mrf.mxu0
    %v335 = vadd.f32 %v249, %v334
    %v336 = vpop.f32.mrf.mxu0
    %337 = vmatprep.mubr.f32.mxu0 0.0
    %v338 = vand.u32 %v70, 4294901760
    %v339 = vsub.f32 %v70, %v338
    %340 = vmatmul.mubr.f32.gmra.mxu0 %v339
    %v341 = vpop.f32.mrf.mxu0
    %v342 = vadd.f32 %v255, %v341
    %v343 = vpop.f32.mrf.mxu0
    %344 = vdwg.mxu0
    %345 = vmatprep.subr.mxu0 0.0
    %346 = vmatpush1.msra.mxu0 0.0
    %347 = vmatprep.subr.mxu0 0.0
    %348 = vmatpush1.msra.mxu0 0.0
    %349 = vmatprep.subr.mxu0 0.0
    %350 = vmatpush1.msra.mxu0 0.0
    %351 = vmatprep.subr.mxu0 0.0
    %352 = vmatpush1.msra.mxu0 0.0
    %353 = vmatprep.subr.mxu0 0.0
    %354 = vmatpush1.msra.mxu0 0.0
    %355 = vmatprep.subr.mxu0 0.0
    %356 = vmatpush1.msra.mxu0 0.0
    %357 = vmatprep.subr.mxu0 0.0
    %358 = vmatpush1.msra.mxu0 0.0
    %359 = vmatprep.subr.mxu0 0.0
    %360 = vmatpush1.msra.mxu0 0.0
    %361 = vmatprep.subr.mxu0 0.0
    %362 = vmatpush1.msra.mxu0 0.0
    %363 = vmatprep.subr.mxu0 0.0
    %364 = vmatpush1.msra.mxu0 0.0
    %365 = vmatprep.subr.mxu0 0.0
    %366 = vmatpush1.msra.mxu0 0.0
    %367 = vmatprep.subr.mxu0 0.0
    %368 = vmatpush1.msra.mxu0 0.0
    %369 = vmatprep.subr.mxu0 0.0
    %v370 = vand.u32 %v59, 4294901760
    %371 = vmatpush1.msra.mxu0 %v370
    %372 = vmatprep.subr.mxu0 0.0
    %v373 = vand.u32 %v58, 4294901760
    %374 = vmatpush1.msra.mxu0 %v373
    %375 = vmatprep.subr.mxu0 0.0
    %v376 = vand.u32 %v57, 4294901760
    %377 = vmatpush1.msra.mxu0 %v376
    %378 = vmatprep.subr.mxu0 0.0
    %v379 = vand.u32 %v56, 4294901760
    %380 = vmatpush1.msra.mxu0 %v379
    %381 = vmatprep.subr.mxu0 0.0
    %382 = vmatpush2.msra.mxu0 0.0
    %383 = vmatprep.subr.mxu0 0.0
    %384 = vmatpush2.msra.mxu0 0.0
    %385 = vmatprep.subr.mxu0 0.0
    %386 = vmatpush2.msra.mxu0 0.0
    %387 = vmatprep.subr.mxu0 0.0
    %388 = vmatpush2.msra.mxu0 0.0
    %389 = vmatprep.subr.mxu0 0.0
    %390 = vmatpush2.msra.mxu0 0.0
    %391 = vmatprep.subr.mxu0 0.0
    %392 = vmatpush2.msra.mxu0 0.0
    %393 = vmatprep.subr.mxu0 0.0
    %394 = vmatpush2.msra.mxu0 0.0
    %395 = vmatprep.subr.mxu0 0.0
    %396 = vmatpush2.msra.mxu0 0.0
    %397 = vmatprep.subr.mxu0 0.0
    %398 = vmatpush2.msra.mxu0 0.0
    %399 = vmatprep.subr.mxu0 0.0
    %400 = vmatpush2.msra.mxu0 0.0
    %401 = vmatprep.subr.mxu0 0.0
    %402 = vmatpush2.msra.mxu0 0.0
    %403 = vmatprep.subr.mxu0 0.0
    %404 = vmatpush2.msra.mxu0 0.0
    %405 = vmatprep.subr.mxu0 0.0
    %406 = vmatpush2.msra.mxu0 0.0
    %407 = vmatprep.subr.mxu0 0.0
    %408 = vmatpush2.msra.mxu0 0.0
    %409 = vmatprep.subr.mxu0 0.0
    %410 = vmatpush2.msra.mxu0 0.0
    %411 = vmatprep.subr.mxu0 0.0
    %412 = vmatpush2.msra.mxu0 0.0
    %413 = vmatprep.mubr.f32.mxu0 0.0
    %v414 = vand.u32 %v67, 4294901760
    %v415 = vsub.f32 %v67, %v414
    %v416 = vand.u32 %v415, 4294901760
    %417 = vmatmul.mubr.f32.gmra.mxu0 %v416
    %v418 = vpop.f32.mrf.mxu0
    %v419 = vadd.f32 %v335, %v418
    %v420 = vpop.f32.mrf.mxu0
    %421 = vmatprep.mubr.f32.mxu0 0.0
    %v422 = vand.u32 %v70, 4294901760
    %v423 = vsub.f32 %v70, %v422
    %v424 = vand.u32 %v423, 4294901760
    %425 = vmatmul.mubr.f32.gmra.mxu0 %v424
    %v426 = vpop.f32.mrf.mxu0
    %v427 = vadd.f32 %v342, %v426
    %v428 = vpop.f32.mrf.mxu0
    %429 = vdwg.mxu0
    %430 = vmatprep.subr.mxu0 0.0
    %431 = vmatpush1.msra.mxu0 0.0
    %432 = vmatprep.subr.mxu0 0.0
    %433 = vmatpush1.msra.mxu0 0.0
    %434 = vmatprep.subr.mxu0 0.0
    %435 = vmatpush1.msra.mxu0 0.0
    %436 = vmatprep.subr.mxu0 0.0
    %437 = vmatpush1.msra.mxu0 0.0
    %438 = vmatprep.subr.mxu0 0.0
    %439 = vmatpush1.msra.mxu0 0.0
    %440 = vmatprep.subr.mxu0 0.0
    %441 = vmatpush1.msra.mxu0 0.0
    %442 = vmatprep.subr.mxu0 0.0
    %443 = vmatpush1.msra.mxu0 0.0
    %444 = vmatprep.subr.mxu0 0.0
    %445 = vmatpush1.msra.mxu0 0.0
    %446 = vmatprep.subr.mxu0 0.0
    %447 = vmatpush1.msra.mxu0 0.0
    %448 = vmatprep.subr.mxu0 0.0
    %449 = vmatpush1.msra.mxu0 0.0
    %450 = vmatprep.subr.mxu0 0.0
    %451 = vmatpush1.msra.mxu0 0.0
    %452 = vmatprep.subr.mxu0 0.0
    %453 = vmatpush1.msra.mxu0 0.0
    %454 = vmatprep.subr.mxu0 0.0
    %v455 = vand.u32 %v59, 4294901760
    %v456 = vsub.f32 %v59, %v455
    %v457 = vand.u32 %v456, 4294901760
    %458 = vmatpush1.msra.mxu0 %v457
    %459 = vmatprep.subr.mxu0 0.0
    %v460 = vand.u32 %v58, 4294901760
    %v461 = vsub.f32 %v58, %v460
    %v462 = vand.u32 %v461, 4294901760
    %463 = vmatpush1.msra.mxu0 %v462
    %464 = vmatprep.subr.mxu0 0.0
    %v465 = vand.u32 %v57, 4294901760
    %v466 = vsub.f32 %v57, %v465
    %v467 = vand.u32 %v466, 4294901760
    %468 = vmatpush1.msra.mxu0 %v467
    %469 = vmatprep.subr.mxu0 0.0
    %v470 = vand.u32 %v56, 4294901760
    %v471 = vsub.f32 %v56, %v470
    %v472 = vand.u32 %v471, 4294901760
    %473 = vmatpush1.msra.mxu0 %v472
    %474 = vmatprep.subr.mxu0 0.0
    %475 = vmatpush2.msra.mxu0 0.0
    %476 = vmatprep.subr.mxu0 0.0
    %477 = vmatpush2.msra.mxu0 0.0
    %478 = vmatprep.subr.mxu0 0.0
    %479 = vmatpush2.msra.mxu0 0.0
    %480 = vmatprep.subr.mxu0 0.0
    %481 = vmatpush2.msra.mxu0 0.0
    %482 = vmatprep.subr.mxu0 0.0
    %483 = vmatpush2.msra.mxu0 0.0
    %484 = vmatprep.subr.mxu0 0.0
    %485 = vmatpush2.msra.mxu0 0.0
    %486 = vmatprep.subr.mxu0 0.0
    %487 = vmatpush2.msra.mxu0 0.0
    %488 = vmatprep.subr.mxu0 0.0
    %489 = vmatpush2.msra.mxu0 0.0
    %490 = vmatprep.subr.mxu0 0.0
    %491 = vmatpush2.msra.mxu0 0.0
    %492 = vmatprep.subr.mxu0 0.0
    %493 = vmatpush2.msra.mxu0 0.0
    %494 = vmatprep.subr.mxu0 0.0
    %495 = vmatpush2.msra.mxu0 0.0
    %496 = vmatprep.subr.mxu0 0.0
    %497 = vmatpush2.msra.mxu0 0.0
    %498 = vmatprep.subr.mxu0 0.0
    %499 = vmatpush2.msra.mxu0 0.0
    %500 = vmatprep.subr.mxu0 0.0
    %501 = vmatpush2.msra.mxu0 0.0
    %502 = vmatprep.subr.mxu0 0.0
    %503 = vmatpush2.msra.mxu0 0.0
    %504 = vmatprep.subr.mxu0 0.0
    %505 = vmatpush2.msra.mxu0 0.0
    %506 = vmatprep.mubr.f32.mxu0 0.0
    %v507 = vand.u32 %v67, 4294901760
    %508 = vmatmul.mubr.f32.gmra.mxu0 %v507
    %v509 = vpop.f32.mrf.mxu0
    %v510 = vadd.f32 %v419, %v509
    %v511 = vpop.f32.mrf.mxu0
    %512 = vmatprep.mubr.f32.mxu0 0.0
    %v513 = vand.u32 %v70, 4294901760
    %514 = vmatmul.mubr.f32.gmra.mxu0 %v513
    %v515 = vpop.f32.mrf.mxu0
    %v516 = vadd.f32 %v427, %v515
    %v517 = vpop.f32.mrf.mxu0
    %518 = vdwg.mxu0
    %519 = vmatprep.subr.mxu0 0.0
    %520 = vmatpush1.msra.mxu0 0.0
    %521 = vmatprep.subr.mxu0 0.0
    %522 = vmatpush1.msra.mxu0 0.0
    %523 = vmatprep.subr.mxu0 0.0
    %524 = vmatpush1.msra.mxu0 0.0
    %525 = vmatprep.subr.mxu0 0.0
    %526 = vmatpush1.msra.mxu0 0.0
    %527 = vmatprep.subr.mxu0 0.0
    %528 = vmatpush1.msra.mxu0 0.0
    %529 = vmatprep.subr.mxu0 0.0
    %530 = vmatpush1.msra.mxu0 0.0
    %531 = vmatprep.subr.mxu0 0.0
    %532 = vmatpush1.msra.mxu0 0.0
    %533 = vmatprep.subr.mxu0 0.0
    %534 = vmatpush1.msra.mxu0 0.0
    %535 = vmatprep.subr.mxu0 0.0
    %536 = vmatpush1.msra.mxu0 0.0
    %537 = vmatprep.subr.mxu0 0.0
    %538 = vmatpush1.msra.mxu0 0.0
    %539 = vmatprep.subr.mxu0 0.0
    %540 = vmatpush1.msra.mxu0 0.0
    %541 = vmatprep.subr.mxu0 0.0
    %542 = vmatpush1.msra.mxu0 0.0
    %543 = vmatprep.subr.mxu0 0.0
    %v544 = vand.u32 %v59, 4294901760
    %545 = vmatpush1.msra.mxu0 %v544
    %546 = vmatprep.subr.mxu0 0.0
    %v547 = vand.u32 %v58, 4294901760
    %548 = vmatpush1.msra.mxu0 %v547
    %549 = vmatprep.subr.mxu0 0.0
    %v550 = vand.u32 %v57, 4294901760
    %551 = vmatpush1.msra.mxu0 %v550
    %552 = vmatprep.subr.mxu0 0.0
    %v553 = vand.u32 %v56, 4294901760
    %554 = vmatpush1.msra.mxu0 %v553
    %555 = vmatprep.subr.mxu0 0.0
    %556 = vmatpush2.msra.mxu0 0.0
    %557 = vmatprep.subr.mxu0 0.0
    %558 = vmatpush2.msra.mxu0 0.0
    %559 = vmatprep.subr.mxu0 0.0
    %560 = vmatpush2.msra.mxu0 0.0
    %561 = vmatprep.subr.mxu0 0.0
    %562 = vmatpush2.msra.mxu0 0.0
    %563 = vmatprep.subr.mxu0 0.0
    %564 = vmatpush2.msra.mxu0 0.0
    %565 = vmatprep.subr.mxu0 0.0
    %566 = vmatpush2.msra.mxu0 0.0
    %567 = vmatprep.subr.mxu0 0.0
    %568 = vmatpush2.msra.mxu0 0.0
    %569 = vmatprep.subr.mxu0 0.0
    %570 = vmatpush2.msra.mxu0 0.0
    %571 = vmatprep.subr.mxu0 0.0
    %572 = vmatpush2.msra.mxu0 0.0
    %573 = vmatprep.subr.mxu0 0.0
    %574 = vmatpush2.msra.mxu0 0.0
    %575 = vmatprep.subr.mxu0 0.0
    %576 = vmatpush2.msra.mxu0 0.0
    %577 = vmatprep.subr.mxu0 0.0
    %578 = vmatpush2.msra.mxu0 0.0
    %579 = vmatprep.subr.mxu0 0.0
    %580 = vmatpush2.msra.mxu0 0.0
    %581 = vmatprep.subr.mxu0 0.0
    %582 = vmatpush2.msra.mxu0 0.0
    %583 = vmatprep.subr.mxu0 0.0
    %584 = vmatpush2.msra.mxu0 0.0
    %585 = vmatprep.subr.mxu0 0.0
    %586 = vmatpush2.msra.mxu0 0.0
    %587 = vmatprep.mubr.f32.mxu0 0.0
    %v588 = vand.u32 %v67, 4294901760
    %589 = vmatmul.mubr.f32.gmra.mxu0 %v588
    %v590 = vpop.f32.mrf.mxu0
    %v591 = vadd.f32 %v510, %v590
    %v592 = vpop.f32.mrf.mxu0
    %593 = vmatprep.mubr.f32.mxu0 0.0
    %v594 = vand.u32 %v70, 4294901760
    %595 = vmatmul.mubr.f32.gmra.mxu0 %v594
    %v596 = vpop.f32.mrf.mxu0
    %v597 = vadd.f32 %v516, %v596
    %v598 = vpop.f32.mrf.mxu0
    %599 = vdwg.mxu0
    %vm600 = vcmask 523264
    %v601 = vsel %vm600, %v591, 0.0
    %602 = vadd.xlane.f32.xlu0 %v601
    %v603 = vpop.xlane.xlu0 %602
    %v604 = vsel %vm600, %v597, 0.0
    %605 = vadd.xlane.f32.xlu0 %v604
    %v606 = vpop.xlane.xlu0 %605
    %v607 = vrcp.pop 64.0
    %v608 = vmul.f32 %v603, %v607
    %v609 = vmul.f32 %v606, %v607
    %v610 = vsub.f32 %v591, %v608
    %v611 = vsub.f32 %v597, %v609
    %v612 = vmul.f32 %v610, %v610
    %v613 = vmul.f32 %v611, %v611
    %v614 = vsel %vm600, %v612, 0.0
    %615 = vadd.xlane.f32.xlu0 %v614
    %v616 = vpop.xlane.xlu0 %615
    %v617 = vsel %vm600, %v613, 0.0
    %618 = vadd.xlane.f32.xlu0 %v617
    %v619 = vpop.xlane.xlu0 %618
    %v620 = vmul.f32 %v616, %v607
    %v621 = vmul.f32 %v619, %v607
    %v622 = vadd.f32 %v620, 1e-12
    %v623 = vadd.f32 %v621, 1e-12
    %v624 = vrsqrt.pop %v622
    %v625 = vrsqrt.pop %v623
    %v626 = vmul.f32 %v610, %v624
    %v627 = vmul.f32 %v611, %v625
    %v628 = vld [vmem:[#allocation7 + $0x1] sm:$0x1]
    %v629 = vlaneseq
    %v630 = vshrl.u32 %v629, 7
    %v631 = vsub.s32 0, %v630
    %v632 = vrot.slane %v628, %v631
    %v633 = vmul.f32 %v626, %v632
    %v634 = vmul.f32 %v627, %v632
    %v635 = vld [vmem:[#allocation7 + $0x2] sm:$0x1]
    %v636 = vlaneseq
    %v637 = vshrl.u32 %v636, 7
    %v638 = vsub.s32 0, %v637
    %v639 = vrot.slane %v635, %v638
    %v640 = vadd.f32 %v633, %v639
    %v641 = vadd.f32 %v634, %v639
    %642 = vst.msk [vmem:[#allocation8] sm:$0xff] %vm600, %v640
    %643 = vst.msk [vmem:[#allocation8 + $0x8] sm:$0xff] %vm600, %v641
    // Predicated region
    $region26: #{tpu_custom_call.1} parent=1 // pred_check
      _
    $region27: #{tpu_custom_call.1} parent=1 // pred_check_branch
      %645 = sbr.rel (0) target = $region29
    $region28: #{tpu_custom_call.1} parent=1 // pred_region
      %s647 = ssub.s32 256, 256
      %648 = vsyncadd [#allocation4], %s647
      %s649 = sshll.u32 [#allocation8], 4
      %s650 = int_to_ptr.vmem [resolvable:$true] %s649
      %655 = dma.vmem_to_hbm [thread:$0]  %s650, 256, %s3, [#allocation4], 128, 128, 8
    $region29: #{tpu_custom_call.1} parent=1 // pred_fallthru
      _
    // Predicated region
    $region30: #{tpu_custom_call.1} parent=1 // pred_check
      _
    $region31: #{tpu_custom_call.1} parent=1 // pred_check_branch
      %657 = sbr.rel (0) target = $region33
    $region32: #{tpu_custom_call.1} parent=1 // pred_region
      %658 = dma.done [#allocation4], 256
    $region33: #{tpu_custom_call.1} parent=1 // pred_fallthru
      _
    %659 = vsyncpa [#allocation3], 1
    %660 = vsyncpa [#allocation6], 1
    %661 = vsyncpa [#allocation4], 1

</llo_original>
